<compile_context>
chip_gen: v7x
topology: tpu7x:2x2x1
jax: 0.10.0
libtpu: 0.0.40
codegen_flags: <defaults>
</compile_context>

<pallas_src>
import functools

import jax
import jax.numpy as jnp
from jax.experimental import pallas as pl
from jax.experimental.pallas import tpu as pltpu


LANE = 128  # TPU vreg lane width


def _round_up(x, m):
    return (x + m - 1) // m * m


def _gating_kernel(x_ref, w_ref, b_ref, u_ref, o_ref, *, n_experts):
    # logits = x @ W^T  (f32 accumulation on the MXU; W^T is zero-padded to 128 lanes so
    # the MXU result is a full lane-dense tile).
    logits = jnp.dot(x_ref[...], w_ref[...], preferred_element_type=jnp.float32)
    # Narrow to the real experts, add bias, subtract per-row uncertainties (all f32).
    logits = logits[:, :n_experts] + b_ref[...] - u_ref[...].astype(jnp.float32)
    # Numerically-stable row-wise softmax over the expert axis.
    m = jnp.max(logits, axis=-1, keepdims=True)
    p = jnp.exp(logits - m)
    inv = pl.reciprocal(jnp.sum(p, axis=-1, keepdims=True), approx=True)  # EUP slot
    o_ref[...] = (p * inv).astype(o_ref.dtype)


def gating_network_forward(x, weight, bias, uncertainties, *, block_b=4096,
                           out_dtype=None, vmem_budget_bytes=40 * 1024 * 1024):
    """softmax(x @ weight.T + bias - uncertainties, axis=1).

    x:             (B, in_dim)
    weight:        (n_experts, in_dim)   [torch nn.Linear layout]
    bias:          (n_experts,)
    uncertainties: (B, n_experts)
    returns:       (B, n_experts) in `out_dtype` (defaults to x.dtype)
    """
    B, in_dim = x.shape
    n_experts = weight.shape[0]
    n_pad = _round_up(n_experts, LANE)
    out_dtype = x.dtype if out_dtype is None else jnp.dtype(out_dtype)

    # --- one-time layout plumbing (tiny): pre-transpose weight, zero-pad expert dim to
    # 128 lanes so the MXU output tile is lane-dense. Bias / uncertainties / output stay
    # at their natural width -> no inflation of the big HBM streams.
    w_t = jnp.zeros((in_dim, n_pad), x.dtype).at[:, :n_experts].set(
        weight.T.astype(x.dtype))
    b2 = bias.astype(jnp.float32).reshape(1, n_experts)

    # --- batch tiling: big tiles amortize the ~0.35us per-grid-step overhead.
    if B <= block_b:
        tm = B                      # single full-extent block (always a legal block shape)
    else:
        tm = _round_up(block_b, 8)  # multiple of 8 rows per tile

    def _vmem_est(tm_):
        # double-buffered streamed blocks, lane-padded as stored in VMEM
        per_row = (_round_up(in_dim, LANE) * x.dtype.itemsize            # x
                   + _round_up(n_experts, LANE) * uncertainties.dtype.itemsize  # u
                   + _round_up(n_experts, LANE) * out_dtype.itemsize)    # out
        resident = _round_up(in_dim, 8) * n_pad * x.dtype.itemsize + LANE * 4
        return 2 * tm_ * per_row + 2 * resident

    while tm > 256 and _vmem_est(tm) > vmem_budget_bytes:
        tm //= 2

    grid = (pl.cdiv(B, tm),)  # last tile may be partial; OOB rows are dropped on store

    kernel = functools.partial(_gating_kernel, n_experts=n_experts)

    bytes_accessed = (x.size * x.dtype.itemsize
                      + w_t.size * w_t.dtype.itemsize
                      + b2.size * 4
                      + uncertainties.size * uncertainties.dtype.itemsize
                      + B * n_experts * out_dtype.itemsize)
    cost = pl.CostEstimate(flops=2 * B * in_dim * n_pad,
                           transcendentals=B * n_experts,
                           bytes_accessed=bytes_accessed)

    vmem_limit = int(min(64 * 1024 * 1024,
                         max(32 * 1024 * 1024, _vmem_est(tm) + (8 << 20))))

    out = pl.pallas_call(
        kernel,
        out_shape=jax.ShapeDtypeStruct((B, n_experts), out_dtype),
        grid_spec=pl.GridSpec(
            grid=grid,
            in_specs=[
                pl.BlockSpec((tm, in_dim), lambda i: (i, 0)),     # x: tiled over batch
                pl.BlockSpec((in_dim, n_pad), lambda i: (0, 0)),  # W^T: resident in VMEM
                pl.BlockSpec((1, n_experts), lambda i: (0, 0)),   # bias: resident
                pl.BlockSpec((tm, n_experts), lambda i: (i, 0)),  # uncertainties: natural width
            ],
            out_specs=pl.BlockSpec((tm, n_experts), lambda i: (i, 0)),
        ),
        compiler_params=pltpu.CompilerParams(
            dimension_semantics=("parallel",),   # batch tiles shard across TCs (megacore)
            vmem_limit_bytes=vmem_limit,
        ),
        cost_estimate=cost,
    )(x, w_t, b2, uncertainties)

    return out


if __name__ == "__main__":
    # Small shapes consistent with the module: in_dim=32, n_experts=31, batch=8.
    in_dim = 32
    n_experts = 31
    batch = 8

    key = jax.random.PRNGKey(0)
    kx, kw, kb, ku = jax.random.split(key, 4)

    x = jax.random.normal(kx, (batch, in_dim), dtype=jnp.float32)
    weight = jax.random.normal(kw, (n_experts, in_dim), dtype=jnp.float32) * 0.1
    bias = jax.random.normal(kb, (n_experts,), dtype=jnp.float32) * 0.1
    uncertainties = jax.random.uniform(ku, (batch, n_experts), dtype=jnp.float32)

    # f32 path (tight check; tolerance accounts for the approx EUP reciprocal).
    y = gating_network_forward(x, weight, bias, uncertainties)
    jax.block_until_ready(y)

    logits_ref = x @ weight.T + bias - uncertainties
    y_ref = jax.nn.softmax(logits_ref, axis=1)
    assert y.shape == (batch, n_experts)
    assert jnp.allclose(y, y_ref, atol=2e-3, rtol=2e-3), float(jnp.max(jnp.abs(y - y_ref)))
    assert jnp.allclose(jnp.sum(y, axis=1), 1.0, atol=5e-3)

    # bf16 I/O path (recommended at scale on v6e/v7x: halves x / W / output HBM bytes;
    # accumulation and softmax math remain f32 inside the kernel).
    y_bf16 = gating_network_forward(x.astype(jnp.bfloat16), weight.astype(jnp.bfloat16),
                                    bias, uncertainties)
    jax.block_until_ready(y_bf16)
    assert y_bf16.dtype == jnp.bfloat16
    assert jnp.allclose(y_bf16.astype(jnp.float32), y_ref, atol=2e-2, rtol=2e-2)

    print("KERNEL_OK")
</pallas_src>

<mosaic_0001>
module attributes {stable_mosaic.version = 11 : i64} {
  func.func @_gating_kernel(%arg0: i32, %arg1: memref<8x32xf32, #tpu.memory_space<vmem>>, %arg2: memref<32x128xf32, #tpu.memory_space<vmem>>, %arg3: memref<1x31xf32, #tpu.memory_space<vmem>>, %arg4: memref<8x31xf32, #tpu.memory_space<vmem>>, %arg5: memref<8x31xf32, #tpu.memory_space<vmem>>) attributes {dimension_semantics = [#tpu.dimension_semantics<parallel>], iteration_bounds = array<i64: 1>, scalar_prefetch = 0 : i64, scratch_operands = 0 : i64, tpu.core_type = #tpu.core_type<tc>, window_params = [{transform_indices = @transform_0, window_bounds = array<i64: 8, 32>}, {pipeline_mode = #tpu.pipeline_mode<synchronous>, transform_indices = @transform_1, window_bounds = array<i64: 32, 128>}, {pipeline_mode = #tpu.pipeline_mode<synchronous>, transform_indices = @transform_2, window_bounds = array<i64: 1, 31>}, {transform_indices = @transform_3, window_bounds = array<i64: 8, 31>}, {transform_indices = @transform_4, window_bounds = array<i64: 8, 31>}]} {
    %c0 = arith.constant 0 : index
    %c0_0 = arith.constant 0 : index
    %0 = vector.load %arg1[%c0, %c0_0] : memref<8x32xf32, #tpu.memory_space<vmem>>, vector<8x32xf32>
    %c0_1 = arith.constant 0 : index
    %c0_2 = arith.constant 0 : index
    %1 = vector.load %arg2[%c0_1, %c0_2] : memref<32x128xf32, #tpu.memory_space<vmem>>, vector<32x128xf32>
    %cst = arith.constant dense<0.000000e+00> : vector<8x128xf32>
    %2 = tpu.matmul %0, %1, %cst {dimension_numbers = #tpu.dot_dimension_numbers<[1], [0], [0], [1], [0, 0, 1, 1], [], []>} : vector<8x32xf32>, vector<32x128xf32>, vector<8x128xf32> -> vector<8x128xf32>
    %3 = vector.extract_strided_slice %2 {offsets = [0, 0], sizes = [8, 31], strides = [1, 1]} : vector<8x128xf32> to vector<8x31xf32>
    %c0_3 = arith.constant 0 : index
    %c0_4 = arith.constant 0 : index
    %4 = vector.load %arg3[%c0_3, %c0_4] : memref<1x31xf32, #tpu.memory_space<vmem>>, vector<1x31xf32>
    %5 = vector.broadcast %4 : vector<1x31xf32> to vector<8x31xf32>
    %6 = arith.addf %3, %5 : vector<8x31xf32>
    %c0_5 = arith.constant 0 : index
    %c0_6 = arith.constant 0 : index
    %7 = vector.load %arg4[%c0_5, %c0_6] : memref<8x31xf32, #tpu.memory_space<vmem>>, vector<8x31xf32>
    %8 = arith.subf %6, %7 : vector<8x31xf32>
    %cst_7 = arith.constant dense<0xFF800000> : vector<8xf32>
    %9 = vector.multi_reduction <maximumf>, %8, %cst_7 [1] : vector<8x31xf32> to vector<8xf32>
    %10 = vector.shape_cast %9 : vector<8xf32> to vector<8x1xf32>
    %11 = vector.broadcast %10 : vector<8x1xf32> to vector<8x31xf32>
    %12 = arith.subf %8, %11 : vector<8x31xf32>
    %13 = math.exp %12 : vector<8x31xf32>
    %cst_8 = arith.constant dense<0.000000e+00> : vector<8xf32>
    %14 = vector.multi_reduction <add>, %13, %cst_8 [1] : vector<8x31xf32> to vector<8xf32>
    %15 = vector.shape_cast %14 : vector<8xf32> to vector<8x1xf32>
    %16 = tpu.reciprocal %15 {approx = true} : vector<8x1xf32> -> vector<8x1xf32>
    %17 = vector.broadcast %16 : vector<8x1xf32> to vector<8x31xf32>
    %18 = arith.mulf %13, %17 : vector<8x31xf32>
    %c0_9 = arith.constant 0 : index
    %c0_10 = arith.constant 0 : index
    %19 = vector.load %arg5[%c0_9, %c0_10] : memref<8x31xf32, #tpu.memory_space<vmem>>, vector<8x31xf32>
    tpu.vector_store %arg5[%c0_9, %c0_10], %18 {strides = array<i32>} : memref<8x31xf32, #tpu.memory_space<vmem>>, vector<8x31xf32>,
    return
  }
  func.func @transform_0(%arg0: i32) -> (i32, i32) {
    %c0_i32 = arith.constant 0 : i32
    %c0_i32_0 = arith.constant 0 : i32
    return %arg0, %c0_i32 : i32, i32
  }
  func.func @transform_1(%arg0: i32) -> (i32, i32) {
    %c0_i32 = arith.constant 0 : i32
    %c0_i32_0 = arith.constant 0 : i32
    %c0_i32_1 = arith.constant 0 : i32
    return %c0_i32, %c0_i32_0 : i32, i32
  }
  func.func @transform_2(%arg0: i32) -> (i32, i32) {
    %c0_i32 = arith.constant 0 : i32
    %c0_i32_0 = arith.constant 0 : i32
    %c0_i32_1 = arith.constant 0 : i32
    return %c0_i32, %c0_i32_0 : i32, i32
  }
  func.func @transform_3(%arg0: i32) -> (i32, i32) {
    %c0_i32 = arith.constant 0 : i32
    %c0_i32_0 = arith.constant 0 : i32
    return %arg0, %c0_i32 : i32, i32
  }
  func.func @transform_4(%arg0: i32) -> (i32, i32) {
    %c0_i32 = arith.constant 0 : i32
    %c0_i32_0 = arith.constant 0 : i32
    return %arg0, %c0_i32 : i32, i32
  }
}

</mosaic_0001>

<llo_original>
// kernel: tpu_custom_call.1
$region0: #{tpu_custom_call.1}
  #allocation0 [shape = 'u32[]', space=smem, size = 0x4, offset = 0x4, fixed_abs, tag = 'smem constant byte address 0x4 - core index']
  #allocation1 [shape = 'u32[144,128]{1,0:T(1,128)}', space=vmem, size = 0x12000, scoped, tag = 'internal scratch']
  %s0 = inlined_call_operand.hbm [shape: f32[8,32], index: 0, kind: input, shape index: {}]
  %s1 = inlined_call_operand.hbm [shape: f32[32,128], index: 1, kind: input, shape index: {}]
  %s2 = inlined_call_operand.vmem [shape: f32[1,31], index: 2, kind: input, shape index: {}]
  %s3 = inlined_call_operand.vmem [shape: f32[8,31], index: 3, kind: input, shape index: {}]
  %s4 = inlined_call_operand.hbm [shape: f32[8,31], index: 4, kind: output, shape index: {}]
  %s5 = sld [smem:[#allocation0]]
  $region34: #{tpu_custom_call.1} parent=0
    _
  %s7 = ssub.s32 1, %s5
  %s8 = scalar_select 0, %s7, %s5
  $region1: #{tpu_custom_call.1} parent=0
    #allocation2 [shape = 'u8[4096]{0}', space=vmem, size = 0x1000, scoped, tag = 'input window, operand 0, single buffered']
    #allocation3 [shape = 's32[1]{0}', space=sflag, size = 0x4, scoped, tag = 'scoped memory for tpu_custom_call.1']
    #allocation4 [shape = 's32[1]{0}', space=sflag, size = 0x4, scoped, tag = 'scoped memory for tpu_custom_call.1']
    #allocation5 [shape = 'u8[16384]{0}', space=vmem, size = 0x4000, scoped, tag = 'input window, operand 1, single buffered']
    #allocation6 [shape = 's32[1]{0}', space=sflag, size = 0x4, scoped, tag = 'scoped memory for tpu_custom_call.1']
    #allocation7 [shape = 'u8[4096]{0}', space=vmem, size = 0x1000, scoped, tag = 'output window, operand 0, single buffered']
    %9 = vsyncpa [#allocation3], 0
    %10 = vsyncpa [#allocation6], 0
    %11 = vsyncpa [#allocation4], 0
    // Predicated region
    $region2: #{tpu_custom_call.1} parent=1 // pred_check
      _
    $region3: #{tpu_custom_call.1} parent=1 // pred_check_branch
      %13 = sbr.rel (0) target = $region5
    $region4: #{tpu_custom_call.1} parent=1 // pred_region
      %s15 = ssub.s32 128, 128
      %16 = vsyncadd [#allocation3], %s15
      %s18 = sshll.u32 [#allocation2], 4
      %s19 = int_to_ptr.vmem [resolvable:$true] %s18
      %21 = dma.hbm_to_vmem [thread:$0]  %s0, 128, %s19, [#allocation3]
    $region5: #{tpu_custom_call.1} parent=1 // pred_fallthru
      _
    // Predicated region
    $region6: #{tpu_custom_call.1} parent=1 // pred_check
      _
    $region7: #{tpu_custom_call.1} parent=1 // pred_check_branch
      %23 = sbr.rel (0) target = $region9
    $region8: #{tpu_custom_call.1} parent=1 // pred_region
      %s25 = ssub.s32 512, 512
      %26 = vsyncadd [#allocation6], %s25
      %s27 = sshll.u32 [#allocation5], 4
      %s28 = int_to_ptr.vmem [resolvable:$true] %s27
      %33 = dma.hbm_to_vmem [thread:$0]  %s1, 512, %s28, [#allocation6], 128, 128, 8
    $region9: #{tpu_custom_call.1} parent=1 // pred_fallthru
      _
    // Predicated region
    $region10: #{tpu_custom_call.1} parent=1 // pred_check
      _
    $region11: #{tpu_custom_call.1} parent=1 // pred_check_branch
      %35 = sbr.rel (0) target = $region13
    $region12: #{tpu_custom_call.1} parent=1 // pred_region
      _
    $region13: #{tpu_custom_call.1} parent=1 // pred_fallthru
      _
    // Predicated region
    $region14: #{tpu_custom_call.1} parent=1 // pred_check
      _
    $region15: #{tpu_custom_call.1} parent=1 // pred_check_branch
      %37 = sbr.rel (0) target = $region17
    $region16: #{tpu_custom_call.1} parent=1 // pred_region
      _
    $region17: #{tpu_custom_call.1} parent=1 // pred_fallthru
      _
    // Predicated region
    $region18: #{tpu_custom_call.1} parent=1 // pred_check
      _
    $region19: #{tpu_custom_call.1} parent=1 // pred_check_branch
      %39 = sbr.rel (0) target = $region21
    $region20: #{tpu_custom_call.1} parent=1 // pred_region
      %40 = dma.done [#allocation3], 128
    $region21: #{tpu_custom_call.1} parent=1 // pred_fallthru
      _
    // Predicated region
    $region22: #{tpu_custom_call.1} parent=1 // pred_check
      _
    $region23: #{tpu_custom_call.1} parent=1 // pred_check_branch
      %42 = sbr.rel (0) target = $region25
    $region24: #{tpu_custom_call.1} parent=1 // pred_region
      %43 = dma.done [#allocation6], 512
    $region25: #{tpu_custom_call.1} parent=1 // pred_fallthru
      _
    %v44 = vld [vmem:[#allocation2] sm:$0xff]
    %v45 = vld [vmem:[#allocation5] sm:$0xff]
    %v46 = vld [vmem:[#allocation5 + $0x8] sm:$0xff]
    %v47 = vld [vmem:[#allocation5 + $0x10] sm:$0xff]
    %v48 = vld [vmem:[#allocation5 + $0x18] sm:$0xff]
    %vm49 = vcmask 261120
    %v51 = vsel %vm49, %v44, 0
    %53 = vmatprep.subr.mxu0 0.0
    %54 = vmatpush1.msra.mxu0 %v45
    %55 = vmatprep.subr.mxu0 0.0
    %56 = vmatpush1.msra.mxu0 %v46
    %57 = vmatprep.subr.mxu0 0.0
    %58 = vmatpush1.msra.mxu0 %v47
    %59 = vmatprep.subr.mxu0 0.0
    %60 = vmatpush1.msra.mxu0 %v48
    %61 = vmatprep.subr.mxu0 0.0
    %62 = vmatpush1.msra.mxu0 0.0
    %63 = vmatprep.subr.mxu0 0.0
    %64 = vmatpush1.msra.mxu0 0.0
    %65 = vmatprep.subr.mxu0 0.0
    %66 = vmatpush1.msra.mxu0 0.0
    %67 = vmatprep.subr.mxu0 0.0
    %68 = vmatpush1.msra.mxu0 0.0
    %69 = vmatprep.subr.mxu0 0.0
    %70 = vmatpush1.msra.mxu0 0.0
    %71 = vmatprep.subr.mxu0 0.0
    %72 = vmatpush1.msra.mxu0 0.0
    %73 = vmatprep.subr.mxu0 0.0
    %74 = vmatpush1.msra.mxu0 0.0
    %75 = vmatprep.subr.mxu0 0.0
    %76 = vmatpush1.msra.mxu0 0.0
    %77 = vmatprep.subr.mxu0 0.0
    %78 = vmatpush1.msra.mxu0 0.0
    %79 = vmatprep.subr.mxu0 0.0
    %80 = vmatpush1.msra.mxu0 0.0
    %81 = vmatprep.subr.mxu0 0.0
    %82 = vmatpush1.msra.mxu0 0.0
    %83 = vmatprep.subr.mxu0 0.0
    %84 = vmatpush1.msra.mxu0 0.0
    %85 = vmatprep.subr.mxu0 0.0
    %86 = vmatpush1.msra.mxu0 0.0
    %87 = vmatprep.subr.mxu0 0.0
    %88 = vmatpush1.msra.mxu0 0.0
    %89 = vmatprep.subr.mxu0 0.0
    %90 = vmatpush1.msra.mxu0 0.0
    %91 = vmatprep.subr.mxu0 0.0
    %92 = vmatpush1.msra.mxu0 0.0
    %93 = vmatprep.subr.mxu0 0.0
    %94 = vmatpush1.msra.mxu0 0.0
    %95 = vmatprep.subr.mxu0 0.0
    %96 = vmatpush1.msra.mxu0 0.0
    %97 = vmatprep.subr.mxu0 0.0
    %98 = vmatpush1.msra.mxu0 0.0
    %99 = vmatprep.subr.mxu0 0.0
    %100 = vmatpush1.msra.mxu0 0.0
    %101 = vmatprep.subr.mxu0 0.0
    %102 = vmatpush1.msra.mxu0 0.0
    %103 = vmatprep.subr.mxu0 0.0
    %104 = vmatpush1.msra.mxu0 0.0
    %105 = vmatprep.subr.mxu0 0.0
    %106 = vmatpush1.msra.mxu0 0.0
    %107 = vmatprep.subr.mxu0 0.0
    %108 = vmatpush1.msra.mxu0 0.0
    %109 = vmatprep.subr.mxu0 0.0
    %110 = vmatpush1.msra.mxu0 0.0
    %111 = vmatprep.subr.mxu0 0.0
    %112 = vmatpush1.msra.mxu0 0.0
    %113 = vmatprep.subr.mxu0 0.0
    %114 = vmatpush1.msra.mxu0 0.0
    %115 = vmatprep.subr.mxu0 0.0
    %116 = vmatpush1.msra.mxu0 0.0
    %117 = vmatprep.mubr.f32.mxu0 0.0
    %118 = vmatmul.mubr.f32.gmra.mrb[0].mxu0 %v51
    %v119 = vpop.f32.mrb[0].mxu0
    %v120 = vadd.f32 0.0, %v119
    %v121 = vpop.f32.mrb[0].mxu0
    %122 = vdwg.mxu0
    %v123 = vld [vmem:[%s2] sm:$0x1]
    %v125 = vlaneseq
    %v126 = vshrl.u32 %v125, 7
    %v127 = vsub.s32 0, %v126
    %v128 = vrot.slane %v123, %v127
    %v130 = vadd.f32 %v120, %v128
    %v131 = vld [vmem:[%s3] sm:$0xff]
    %v132 = vsub.f32 %v130, %v131
    %vm133 = vcmask 252928
    %v134 = vsel %vm133, %v132, -inf
    %135 = vmax.xlane.f32.xlu0 %v134
    %v136 = vpop.xlane.xlu0 %135
    %v137 = vsub.f32 %v132, %v136
    %v138 = vmul.f32 %v137, 1.442695
    %v139 = vpow.pop %v138
    %v140 = vsel %vm133, %v139, 0.0
    %141 = vadd.xlane.f32.xlu0 %v140
    %v142 = vpop.xlane.xlu0 %141
    %v143 = vrcp.pop %v142
    %v144 = vmul.f32 %v139, %v143
    %145 = vst.msk [vmem:[#allocation7] sm:$0xff] %vm133, %v144
    // Predicated region
    $region26: #{tpu_custom_call.1} parent=1 // pred_check
      _
    $region27: #{tpu_custom_call.1} parent=1 // pred_check_branch
      %147 = sbr.rel (0) target = $region29
    $region28: #{tpu_custom_call.1} parent=1 // pred_region
      %s149 = ssub.s32 128, 128
      %150 = vsyncadd [#allocation4], %s149
      %s152 = sshll.u32 [#allocation7], 4
      %s153 = int_to_ptr.vmem [resolvable:$true] %s152
      %155 = dma.vmem_to_hbm [thread:$0]  %s153, 128, %s4, [#allocation4]
    $region29: #{tpu_custom_call.1} parent=1 // pred_fallthru
      _
    // Predicated region
    $region30: #{tpu_custom_call.1} parent=1 // pred_check
      _
    $region31: #{tpu_custom_call.1} parent=1 // pred_check_branch
      %157 = sbr.rel (0) target = $region33
    $region32: #{tpu_custom_call.1} parent=1 // pred_region
      %158 = dma.done [#allocation4], 128
    $region33: #{tpu_custom_call.1} parent=1 // pred_fallthru
      _
    %159 = vsyncpa [#allocation3], 1
    %160 = vsyncpa [#allocation6], 1
    %161 = vsyncpa [#allocation4], 1

</llo_original>
